<compile_context>
chip_gen: v6e
topology: v6e:2x2x1
jax: 0.10.0
libtpu: 0.0.40
codegen_flags: <defaults>
</compile_context>

<pallas_src>
import functools

import jax
import jax.numpy as jnp
from jax.experimental import pallas as pl
from jax.experimental.pallas import tpu as pltpu


def _channel_attention_kernel(x_ref, w1t_ref, w2t_ref, o_ref,
                              sum_acc, max_acc,
                              *, hw_true, hw_tile, lane_w, needs_mask):
    """Grid = (batch tiles, spatial tiles); spatial axis is the reduction axis.

    x_ref   : (B_tile, C, hw_tile)       input block (spatial flattened)
    w1t_ref : (C, Cr)                    first 1x1-conv weight, pre-transposed
    w2t_ref : (Cr, C)                    second 1x1-conv weight, pre-transposed
    o_ref   : (B_tile, C)                sigmoid(channel-attention logits)
    sum_acc : (B_tile, C, lane_w) f32    lane-wide running spatial sum
    max_acc : (B_tile, C, lane_w) f32    lane-wide running spatial max
    """
    k = pl.program_id(1)
    last_k = pl.num_programs(1) - 1
    n_chunks = hw_tile // lane_w

    @pl.when(k == 0)
    def _init():
        sum_acc[...] = jnp.zeros_like(sum_acc)
        max_acc[...] = jnp.full_like(max_acc, -jnp.inf)

    def accumulate(masked):
        # Pure elementwise accumulation over lane-width chunks of the tile.
        # The cross-lane reduce is deferred to the finalize step, so the
        # steady state co-issues on the VPU underneath the input DMA.
        if masked:
            lane = jax.lax.broadcasted_iota(jnp.int32, (1, 1, lane_w), 2)
            remaining = hw_true - k * hw_tile
        s = None
        m = None
        for j in range(n_chunks):
            c = x_ref[:, :, j * lane_w:(j + 1) * lane_w].astype(jnp.float32)
            if masked:
                valid = lane < (remaining - j * lane_w)
                c_s = jnp.where(valid, c, 0.0)
                c_m = jnp.where(valid, c, -jnp.inf)
            else:
                c_s = c
                c_m = c
            s = c_s if s is None else s + c_s
            m = c_m if m is None else jnp.maximum(m, c_m)
        sum_acc[...] += s
        max_acc[...] = jnp.maximum(max_acc[...], m)

    if needs_mask:
        # Masking only ever runs on the (ragged) last spatial tile.
        @pl.when(k != last_k)
        def _steady():
            accumulate(masked=False)

        @pl.when(k == last_k)
        def _tail():
            accumulate(masked=True)
    else:
        accumulate(masked=False)

    @pl.when(k == last_k)
    def _finalize():
        # One-time cross-lane reductions (XLU) of the lane-wide accumulators.
        avg_p = jnp.sum(sum_acc[...], axis=-1) * jnp.float32(1.0 / hw_true)
        max_p = jnp.max(max_acc[...], axis=-1)                 # (B_tile, C)
        # Stack both pooled vectors -> one pass through the shared MLP.
        pooled = jnp.concatenate([avg_p, max_p], axis=0)       # (2*B_tile, C)

        w1t = w1t_ref[...].astype(jnp.float32)                 # (C, Cr)
        w2t = w2t_ref[...].astype(jnp.float32)                 # (Cr, C)
        h = jnp.dot(pooled, w1t, preferred_element_type=jnp.float32)
        h = jnp.maximum(h, 0.0)                                 # ReLU
        logits2 = jnp.dot(h, w2t, preferred_element_type=jnp.float32)

        bt = avg_p.shape[0]
        logits = logits2[:bt] + logits2[bt:]
        # sigmoid: exp on the EUP + exact reciprocal.
        o_ref[...] = pl.reciprocal(1.0 + jnp.exp(-logits)).astype(o_ref.dtype)


def _chip_vmem_budgets():
    """Return (per-x-buffer byte budget, vmem_limit cap) for this chip."""
    try:
        phys = int(pltpu.get_tpu_info().vmem_capacity_bytes)
    except Exception:
        phys = 64 << 20                       # conservative (v7x-sized) fallback
    if phys >= (100 << 20):                   # v5e / v6e: 128 MiB physical VMEM
        return 24 << 20, min(phys - (16 << 20), 100 << 20)
    # v7x: 64 MiB physical per TensorCore -> leave headroom for Mosaic scratch.
    return 10 << 20, max(phys - (12 << 20), 32 << 20)


def _select_tiles(B, C, HW, itemsize, *, target_block_bytes, per_buffer_bytes):
    """Pick (b_tile, hw_tile).

    b_tile candidates are multiples of 8 dividing B (or B itself) so the
    (b_tile, C) output block always obeys the (8, 128) tiling rule.  hw_tile
    is a multiple of 128 (or the full H*W when H*W < 128).  Preference:
    blocks big enough to amortise the ~0.35 us per-step overhead; keep the
    contiguous spatial run long (shrink b_tile before hw_tile); otherwise
    prefer >=2 batch blocks so the 'parallel' axis feeds both v7x cores.
    """
    b_candidates = sorted({d for d in range(8, B + 1, 8) if B % d == 0} | {B})
    hw_cap = HW if HW < 128 else (HW // 128) * 128

    choices = []
    for b in b_candidates:
        if HW < 128:
            hw = HW
        else:
            lane_bytes = b * C * itemsize            # bytes per spatial position
            lanes = (per_buffer_bytes // lane_bytes // 128) * 128
            hw = min(max(int(lanes), 128), hw_cap)
        lane_w = 128 if hw % 128 == 0 else hw
        x_block = b * C * hw * itemsize
        acc_bytes = 2 * b * C * lane_w * 4
        fits = x_block <= per_buffer_bytes and acc_bytes <= per_buffer_bytes
        if not fits and b != b_candidates[0]:
            continue                                  # keep smallest as fallback
        choices.append((b, hw, x_block))

    meeting = [c for c in choices if c[2] >= target_block_bytes]
    if meeting:
        # Smallest batch tile that reaches the target block size: keeps the
        # contiguous DMA run and the parallel batch axis as long as possible.
        b_tile, hw_tile, _ = min(meeting, key=lambda c: c[0])
    else:
        # Largest block available; prefer >=2 batch blocks (megacore) when
        # that costs at most 2x in block size.
        best_bytes = max(c[2] for c in choices)
        pref = [c for c in choices if B // c[0] >= 2 and 2 * c[2] >= best_bytes]
        pool = pref if pref else choices
        b_tile, hw_tile, _ = max(pool, key=lambda c: (c[2], -c[0]))
    return b_tile, hw_tile


def channel_attention(x, w1, w2, *, target_block_bytes=None,
                      per_buffer_bytes=None):
    """CBAM channel attention.

    x : (B, C, H, W)   input feature map
    w1: (C//r, C)      first 1x1-conv weight (squeezed from (C//r, C, 1, 1))
    w2: (C, C//r)      second 1x1-conv weight (squeezed from (C, C//r, 1, 1))
    Returns (B, C, 1, 1) attention map, matching the PyTorch module.
    """
    B, C, H, W = x.shape
    HW = H * W
    x_flat = x.reshape(B, C, HW)
    itemsize = x_flat.dtype.itemsize

    auto_buf, vmem_cap = _chip_vmem_budgets()
    if per_buffer_bytes is None:
        per_buffer_bytes = auto_buf
    if target_block_bytes is None:
        target_block_bytes = 4 << 20

    b_tile, hw_tile = _select_tiles(B, C, HW, itemsize,
                                    target_block_bytes=target_block_bytes,
                                    per_buffer_bytes=per_buffer_bytes)
    lane_w = 128 if hw_tile % 128 == 0 else hw_tile
    needs_mask = (HW % hw_tile) != 0
    grid = (B // b_tile, pl.cdiv(HW, hw_tile))

    # Pre-transpose weights in XLA (free) so the kernel does no transposes.
    w1t = jnp.transpose(w1)          # (C, Cr)
    w2t = jnp.transpose(w2)          # (Cr, C)
    Cr = w1.shape[0]

    kernel = functools.partial(_channel_attention_kernel,
                               hw_true=HW, hw_tile=hw_tile,
                               lane_w=lane_w, needs_mask=needs_mask)

    # Explicit VMEM budget: double-buffered x block + resident weights/output
    # + lane-wide accumulators, with headroom; capped per-chip (v7x ~52 MiB,
    # v5e/v6e up to ~100 MiB).
    x_block = b_tile * C * hw_tile * itemsize
    w_bytes = int(w1t.size + w2t.size) * w1t.dtype.itemsize
    o_block = b_tile * C * x.dtype.itemsize
    acc_bytes = 2 * b_tile * C * lane_w * 4
    need = 2 * x_block + 2 * w_bytes + 2 * o_block + acc_bytes + (6 << 20)
    vmem_limit = int(min(max(need, 32 << 20), vmem_cap))

    out = pl.pallas_call(
        kernel,
        out_shape=jax.ShapeDtypeStruct((B, C), x.dtype),
        grid_spec=pltpu.PrefetchScalarGridSpec(
            num_scalar_prefetch=0,
            grid=grid,
            in_specs=[
                pl.BlockSpec((b_tile, C, hw_tile), lambda b, k: (b, 0, k)),
                # Constant index_map -> weights DMA'd once, kept resident.
                pl.BlockSpec((C, Cr), lambda b, k: (0, 0)),
                pl.BlockSpec((Cr, C), lambda b, k: (0, 0)),
            ],
            out_specs=pl.BlockSpec((b_tile, C), lambda b, k: (b, 0)),
            scratch_shapes=[pltpu.VMEM((b_tile, C, lane_w), jnp.float32),
                            pltpu.VMEM((b_tile, C, lane_w), jnp.float32)],
        ),
        compiler_params=pltpu.CompilerParams(
            dimension_semantics=("parallel", "arbitrary"),
            vmem_limit_bytes=vmem_limit,
        ),
    )(x_flat, w1t, w2t)
    return out.reshape(B, C, 1, 1)


def reference_channel_attention(x, w1, w2):
    """Pure-JAX reference mirroring the PyTorch forward."""
    avg_p = jnp.mean(x, axis=(2, 3))             # (B, C)
    max_p = jnp.max(x, axis=(2, 3))              # (B, C)

    def mlp(p):
        return jnp.maximum(p @ w1.T, 0.0) @ w2.T

    return jax.nn.sigmoid(mlp(avg_p) + mlp(max_p))[:, :, None, None]


if __name__ == "__main__":
    key = jax.random.PRNGKey(0)
    keys = jax.random.split(key, 12)

    def make_case(kx, kw1, kw2, B, C, H, W, ratio):
        Cr = max(C // ratio, 1)
        x = jax.random.normal(kx, (B, C, H, W), dtype=jnp.float32)
        w1 = jax.random.normal(kw1, (Cr, C), dtype=jnp.float32) * (1.0 / (C ** 0.5))
        w2 = jax.random.normal(kw2, (C, Cr), dtype=jnp.float32) * (1.0 / (Cr ** 0.5))
        return x, w1, w2

    def check(x, w1, w2, **kw):
        out = channel_attention(x, w1, w2, **kw)
        jax.block_until_ready(out)
        ref = reference_channel_attention(x, w1, w2)
        assert out.shape == ref.shape, (out.shape, ref.shape)
        err = float(jnp.max(jnp.abs(out - ref)))
        assert err < 1e-5, err

    # Case 1: HW=256 fits a single full-extent spatial block (B=2, C=64, r=16).
    check(*make_case(keys[0], keys[1], keys[2], 2, 64, 16, 16, 16))

    # Case 2: HW=144 -> hw_tile=128 with a masked ragged tail on the last step.
    check(*make_case(keys[3], keys[4], keys[5], 3, 32, 12, 12, 8))

    # Case 3: tiny per-buffer budget forces two unmasked spatial steps.
    check(*make_case(keys[6], keys[7], keys[8], 2, 64, 16, 16, 16),
          per_buffer_bytes=1 << 16)

    # Case 4: HW < 128 with B=16 -> multiple-of-8 batch tiling, 2 batch blocks.
    check(*make_case(keys[9], keys[10], keys[11], 16, 32, 8, 8, 8))

    print("KERNEL_OK")
</pallas_src>

<mosaic_0001>
module attributes {stable_mosaic.version = 11 : i64} {
  func.func @_channel_attention_kernel(%arg0: i32, %arg1: i32, %arg2: memref<2x64x256xf32, #tpu.memory_space<vmem>>, %arg3: memref<64x4xf32, #tpu.memory_space<vmem>>, %arg4: memref<4x64xf32, #tpu.memory_space<vmem>>, %arg5: memref<2x64xf32, #tpu.memory_space<vmem>>, %arg6: memref<2x64x128xf32, #tpu.memory_space<vmem>>, %arg7: memref<2x64x128xf32, #tpu.memory_space<vmem>>) attributes {dimension_semantics = [#tpu.dimension_semantics<parallel>, #tpu.dimension_semantics<arbitrary>], iteration_bounds = array<i64: 1, 1>, scalar_prefetch = 0 : i64, scratch_operands = 2 : i64, tpu.core_type = #tpu.core_type<tc>, window_params = [{transform_indices = @transform_0, window_bounds = array<i64: 2, 64, 256>}, {pipeline_mode = #tpu.pipeline_mode<synchronous>, transform_indices = @transform_1, window_bounds = array<i64: 64, 4>}, {pipeline_mode = #tpu.pipeline_mode<synchronous>, transform_indices = @transform_2, window_bounds = array<i64: 4, 64>}, {transform_indices = @transform_3, window_bounds = array<i64: 2, 64>}]} {
    %c0_i32 = arith.constant 0 : i32
    %0 = arith.cmpi eq, %arg1, %c0_i32 : i32
    %1 = arith.extui %0 : i1 to i32
    %c0_i32_0 = arith.constant 0 : i32
    %2 = arith.cmpi ne, %1, %c0_i32_0 : i32
    scf.if %2 {
      %cst = arith.constant 0.000000e+00 : f32
      %16 = vector.broadcast %cst : f32 to vector<2x64x128xf32>
      %c0_19 = arith.constant 0 : index
      %c0_20 = arith.constant 0 : index
      %c0_21 = arith.constant 0 : index
      %17 = vector.load %arg6[%c0_19, %c0_20, %c0_21] : memref<2x64x128xf32, #tpu.memory_space<vmem>>, vector<2x64x128xf32>
      tpu.vector_store %arg6[%c0_19, %c0_20, %c0_21], %16 {strides = array<i32>} : memref<2x64x128xf32, #tpu.memory_space<vmem>>, vector<2x64x128xf32>,
      %cst_22 = arith.constant 0xFF800000 : f32
      %18 = vector.broadcast %cst_22 : f32 to vector<2x64x128xf32>
      %c0_23 = arith.constant 0 : index
      %c0_24 = arith.constant 0 : index
      %c0_25 = arith.constant 0 : index
      %19 = vector.load %arg7[%c0_23, %c0_24, %c0_25] : memref<2x64x128xf32, #tpu.memory_space<vmem>>, vector<2x64x128xf32>
      tpu.vector_store %arg7[%c0_23, %c0_24, %c0_25], %18 {strides = array<i32>} : memref<2x64x128xf32, #tpu.memory_space<vmem>>, vector<2x64x128xf32>,
    } else {
    }
    %c0 = arith.constant 0 : index
    %c0_1 = arith.constant 0 : index
    %c0_2 = arith.constant 0 : index
    %3 = vector.load %arg2[%c0, %c0_1, %c0_2] : memref<2x64x256xf32, #tpu.memory_space<vmem>>, vector<2x64x128xf32>
    %c0_3 = arith.constant 0 : index
    %c0_4 = arith.constant 0 : index
    %c128 = arith.constant 128 : index
    %4 = vector.load %arg2[%c0_3, %c0_4, %c128] : memref<2x64x256xf32, #tpu.memory_space<vmem>>, vector<2x64x128xf32>
    %5 = arith.addf %3, %4 : vector<2x64x128xf32>
    %6 = arith.maximumf %3, %4 : vector<2x64x128xf32>
    %c0_5 = arith.constant 0 : index
    %c0_6 = arith.constant 0 : index
    %c0_7 = arith.constant 0 : index
    %7 = vector.load %arg6[%c0_5, %c0_6, %c0_7] : memref<2x64x128xf32, #tpu.memory_space<vmem>>, vector<2x64x128xf32>
    %8 = arith.addf %7, %5 : vector<2x64x128xf32>
    %c0_8 = arith.constant 0 : index
    %c0_9 = arith.constant 0 : index
    %c0_10 = arith.constant 0 : index
    %9 = vector.load %arg6[%c0_8, %c0_9, %c0_10] : memref<2x64x128xf32, #tpu.memory_space<vmem>>, vector<2x64x128xf32>
    tpu.vector_store %arg6[%c0_8, %c0_9, %c0_10], %8 {strides = array<i32>} : memref<2x64x128xf32, #tpu.memory_space<vmem>>, vector<2x64x128xf32>,
    %c0_11 = arith.constant 0 : index
    %c0_12 = arith.constant 0 : index
    %c0_13 = arith.constant 0 : index
    %10 = vector.load %arg7[%c0_11, %c0_12, %c0_13] : memref<2x64x128xf32, #tpu.memory_space<vmem>>, vector<2x64x128xf32>
    %11 = arith.maximumf %10, %6 : vector<2x64x128xf32>
    %c0_14 = arith.constant 0 : index
    %c0_15 = arith.constant 0 : index
    %c0_16 = arith.constant 0 : index
    %12 = vector.load %arg7[%c0_14, %c0_15, %c0_16] : memref<2x64x128xf32, #tpu.memory_space<vmem>>, vector<2x64x128xf32>
    tpu.vector_store %arg7[%c0_14, %c0_15, %c0_16], %11 {strides = array<i32>} : memref<2x64x128xf32, #tpu.memory_space<vmem>>, vector<2x64x128xf32>,
    %c0_i32_17 = arith.constant 0 : i32
    %13 = arith.cmpi eq, %arg1, %c0_i32_17 : i32
    %14 = arith.extui %13 : i1 to i32
    %c0_i32_18 = arith.constant 0 : i32
    %15 = arith.cmpi ne, %14, %c0_i32_18 : i32
    scf.if %15 {
      %c0_19 = arith.constant 0 : index
      %c0_20 = arith.constant 0 : index
      %c0_21 = arith.constant 0 : index
      %16 = vector.load %arg6[%c0_19, %c0_20, %c0_21] : memref<2x64x128xf32, #tpu.memory_space<vmem>>, vector<2x64x128xf32>
      %cst = arith.constant dense<0.000000e+00> : vector<2x64xf32>
      %17 = vector.multi_reduction <add>, %16, %cst [2] : vector<2x64x128xf32> to vector<2x64xf32>
      %cst_22 = arith.constant 3.906250e-03 : f32
      %18 = vector.broadcast %cst_22 : f32 to vector<2x64xf32>
      %19 = arith.mulf %17, %18 : vector<2x64xf32>
      %c0_23 = arith.constant 0 : index
      %c0_24 = arith.constant 0 : index
      %c0_25 = arith.constant 0 : index
      %20 = vector.load %arg7[%c0_23, %c0_24, %c0_25] : memref<2x64x128xf32, #tpu.memory_space<vmem>>, vector<2x64x128xf32>
      %cst_26 = arith.constant dense<0xFF800000> : vector<2x64xf32>
      %21 = vector.multi_reduction <maximumf>, %20, %cst_26 [2] : vector<2x64x128xf32> to vector<2x64xf32>
      %22 = tpu.concatenate %19, %21 in 0 : vector<2x64xf32>, vector<2x64xf32> -> vector<4x64xf32>
      %c0_27 = arith.constant 0 : index
      %c0_28 = arith.constant 0 : index
      %23 = vector.load %arg3[%c0_27, %c0_28] : memref<64x4xf32, #tpu.memory_space<vmem>>, vector<64x4xf32>
      %c0_29 = arith.constant 0 : index
      %c0_30 = arith.constant 0 : index
      %24 = vector.load %arg4[%c0_29, %c0_30] : memref<4x64xf32, #tpu.memory_space<vmem>>, vector<4x64xf32>
      %cst_31 = arith.constant dense<0.000000e+00> : vector<4x4xf32>
      %25 = tpu.matmul %22, %23, %cst_31 {dimension_numbers = #tpu.dot_dimension_numbers<[1], [0], [0], [1], [0, 0, 1, 1], [], []>} : vector<4x64xf32>, vector<64x4xf32>, vector<4x4xf32> -> vector<4x4xf32>
      %cst_32 = arith.constant 0.000000e+00 : f32
      %26 = vector.broadcast %cst_32 : f32 to vector<4x4xf32>
      %27 = arith.maximumf %25, %26 : vector<4x4xf32>
      %cst_33 = arith.constant dense<0.000000e+00> : vector<4x64xf32>
      %28 = tpu.matmul %27, %24, %cst_33 {dimension_numbers = #tpu.dot_dimension_numbers<[1], [0], [0], [1], [0, 0, 1, 1], [], []>} : vector<4x4xf32>, vector<4x64xf32>, vector<4x64xf32> -> vector<4x64xf32>
      %29 = vector.extract_strided_slice %28 {offsets = [0, 0], sizes = [2, 64], strides = [1, 1]} : vector<4x64xf32> to vector<2x64xf32>
      %30 = vector.extract_strided_slice %28 {offsets = [2, 0], sizes = [2, 64], strides = [1, 1]} : vector<4x64xf32> to vector<2x64xf32>
      %31 = arith.addf %29, %30 : vector<2x64xf32>
      %cst_34 = arith.constant 0.000000e+00 : f32
      %32 = vector.broadcast %cst_34 : f32 to vector<2x64xf32>
      %33 = arith.subf %32, %31 : vector<2x64xf32>
      %34 = math.exp %33 : vector<2x64xf32>
      %cst_35 = arith.constant 1.000000e+00 : f32
      %35 = vector.broadcast %cst_35 : f32 to vector<2x64xf32>
      %36 = arith.addf %35, %34 : vector<2x64xf32>
      %37 = tpu.reciprocal %36 : vector<2x64xf32> -> vector<2x64xf32>
      %c0_36 = arith.constant 0 : index
      %c0_37 = arith.constant 0 : index
      %38 = vector.load %arg5[%c0_36, %c0_37] : memref<2x64xf32, #tpu.memory_space<vmem>>, vector<2x64xf32>
      tpu.vector_store %arg5[%c0_36, %c0_37], %37 {strides = array<i32>} : memref<2x64xf32, #tpu.memory_space<vmem>>, vector<2x64xf32>,
    } else {
    }
    return
  }
  func.func @transform_0(%arg0: i32, %arg1: i32) -> (i32, i32, i32) {
    %c0_i32 = arith.constant 0 : i32
    %c0_i32_0 = arith.constant 0 : i32
    return %arg0, %c0_i32, %arg1 : i32, i32, i32
  }
  func.func @transform_1(%arg0: i32, %arg1: i32) -> (i32, i32) {
    %c0_i32 = arith.constant 0 : i32
    %c0_i32_0 = arith.constant 0 : i32
    %c0_i32_1 = arith.constant 0 : i32
    return %c0_i32, %c0_i32_0 : i32, i32
  }
  func.func @transform_2(%arg0: i32, %arg1: i32) -> (i32, i32) {
    %c0_i32 = arith.constant 0 : i32
    %c0_i32_0 = arith.constant 0 : i32
    %c0_i32_1 = arith.constant 0 : i32
    return %c0_i32, %c0_i32_0 : i32, i32
  }
  func.func @transform_3(%arg0: i32, %arg1: i32) -> (i32, i32) {
    %c0_i32 = arith.constant 0 : i32
    %c0_i32_0 = arith.constant 0 : i32
    return %arg0, %c0_i32 : i32, i32
  }
}

</mosaic_0001>

<llo_original>
// kernel: tpu_custom_call.1
$region0: #{tpu_custom_call.1}
  #allocation0 [shape = 'u32[]', space=smem, size = 0x4, offset = 0x4, fixed_abs, tag = 'smem constant byte address 0x4 - core index']
  #allocation1 [shape = 'u32[144,128]{1,0:T(1,128)}', space=vmem, size = 0x12000, scoped, tag = 'internal scratch']
  #allocation2 [shape = 'f32[2,64,128]{2,1,0:T(8,128)}', space=vmem, size = 0x10000, scoped, tag = 'scratch operand']
  #allocation3 [shape = 'f32[2,64,128]{2,1,0:T(8,128)}', space=vmem, size = 0x10000, scoped, tag = 'scratch operand']
  %s0 = inlined_call_operand.hbm [shape: f32[2,64,256], index: 0, kind: input, shape index: {}]
  %s1 = inlined_call_operand.vmem [shape: f32[64,4], index: 1, kind: input, shape index: {}]
  %s2 = inlined_call_operand.vmem [shape: f32[4,64], index: 2, kind: input, shape index: {}]
  %s3 = inlined_call_operand.hbm [shape: f32[2,64], index: 3, kind: output, shape index: {}]
  %s4 = sld [smem:[#allocation0]]
  $region34: #{tpu_custom_call.1} parent=0
    _
  %s6 = ssub.s32 1, %s4
  %s7 = scalar_select 0, %s6, %s4
  $region1: #{tpu_custom_call.1} parent=0
    #allocation4 [shape = 'u8[131072]{0}', space=vmem, size = 0x20000, scoped, tag = 'input window, operand 0, single buffered']
    #allocation5 [shape = 's32[1]{0}', space=sflag, size = 0x4, scoped, tag = 'scoped memory for tpu_custom_call.1']
    #allocation6 [shape = 's32[1]{0}', space=sflag, size = 0x4, scoped, tag = 'scoped memory for tpu_custom_call.1']
    #allocation7 [shape = 'u8[1024]{0}', space=vmem, size = 0x400, scoped, tag = 'output window, operand 0, single buffered']
    %8 = vsyncpa [#allocation5], 0
    %9 = vsyncpa [#allocation6], 0
    // Predicated region
    $region2: #{tpu_custom_call.1} parent=1 // pred_check
      _
    $region3: #{tpu_custom_call.1} parent=1 // pred_check_branch
      %11 = sbr.rel (0) target = $region5
    $region4: #{tpu_custom_call.1} parent=1 // pred_region
      %s13 = ssub.s32 4096, 4096
      %14 = vsyncadd [#allocation5], %s13
      %s15 = sshll.u32 [#allocation4], 4
      %s16 = int_to_ptr.vmem [resolvable:$true] %s15
      %21 = dma.hbm_to_vmem [thread:$0]  %s0, 4096, %s16, [#allocation5], 256, 256, 16
    $region5: #{tpu_custom_call.1} parent=1 // pred_fallthru
      _
    // Predicated region
    $region6: #{tpu_custom_call.1} parent=1 // pred_check
      _
    $region7: #{tpu_custom_call.1} parent=1 // pred_check_branch
      %23 = sbr.rel (0) target = $region9
    $region8: #{tpu_custom_call.1} parent=1 // pred_region
      _
    $region9: #{tpu_custom_call.1} parent=1 // pred_fallthru
      _
    // Predicated region
    $region10: #{tpu_custom_call.1} parent=1 // pred_check
      _
    $region11: #{tpu_custom_call.1} parent=1 // pred_check_branch
      %25 = sbr.rel (0) target = $region13
    $region12: #{tpu_custom_call.1} parent=1 // pred_region
      _
    $region13: #{tpu_custom_call.1} parent=1 // pred_fallthru
      _
    // Predicated region
    $region14: #{tpu_custom_call.1} parent=1 // pred_check
      _
    $region15: #{tpu_custom_call.1} parent=1 // pred_check_branch
      %27 = sbr.rel (0) target = $region17
    $region16: #{tpu_custom_call.1} parent=1 // pred_region
      %28 = dma.done [#allocation5], 4096
    $region17: #{tpu_custom_call.1} parent=1 // pred_fallthru
      _
    %p29 = scmp.eq.s32.totalorder 0, 0
    // Predicated region
    $region18: #{tpu_custom_call.1} parent=1 // pred_check
      %p30 = pneg %p29
    $region19: #{tpu_custom_call.1} parent=1 // pred_check_branch
      %32 = sbr.rel (%p30) target = $region21
    $region20: #{tpu_custom_call.1} parent=1 // pred_region
      %33 = vst [vmem:[#allocation2] sm:$0xff] 0.0
      %34 = vst [vmem:[#allocation2 + $0x8] sm:$0xff] 0.0
      %35 = vst [vmem:[#allocation2 + $0x10] sm:$0xff] 0.0
      %36 = vst [vmem:[#allocation2 + $0x18] sm:$0xff] 0.0
      %37 = vst [vmem:[#allocation2 + $0x20] sm:$0xff] 0.0
      %38 = vst [vmem:[#allocation2 + $0x28] sm:$0xff] 0.0
      %39 = vst [vmem:[#allocation2 + $0x30] sm:$0xff] 0.0
      %40 = vst [vmem:[#allocation2 + $0x38] sm:$0xff] 0.0
      %41 = vst [vmem:[#allocation2 + $0x40] sm:$0xff] 0.0
      %42 = vst [vmem:[#allocation2 + $0x48] sm:$0xff] 0.0
      %43 = vst [vmem:[#allocation2 + $0x50] sm:$0xff] 0.0
      %44 = vst [vmem:[#allocation2 + $0x58] sm:$0xff] 0.0
      %45 = vst [vmem:[#allocation2 + $0x60] sm:$0xff] 0.0
      %46 = vst [vmem:[#allocation2 + $0x68] sm:$0xff] 0.0
      %47 = vst [vmem:[#allocation2 + $0x70] sm:$0xff] 0.0
      %48 = vst [vmem:[#allocation2 + $0x78] sm:$0xff] 0.0
      %49 = vst [vmem:[#allocation3] sm:$0xff] -inf
      %50 = vst [vmem:[#allocation3 + $0x8] sm:$0xff] -inf
      %51 = vst [vmem:[#allocation3 + $0x10] sm:$0xff] -inf
      %52 = vst [vmem:[#allocation3 + $0x18] sm:$0xff] -inf
      %53 = vst [vmem:[#allocation3 + $0x20] sm:$0xff] -inf
      %54 = vst [vmem:[#allocation3 + $0x28] sm:$0xff] -inf
      %55 = vst [vmem:[#allocation3 + $0x30] sm:$0xff] -inf
      %56 = vst [vmem:[#allocation3 + $0x38] sm:$0xff] -inf
      %57 = vst [vmem:[#allocation3 + $0x40] sm:$0xff] -inf
      %58 = vst [vmem:[#allocation3 + $0x48] sm:$0xff] -inf
      %59 = vst [vmem:[#allocation3 + $0x50] sm:$0xff] -inf
      %60 = vst [vmem:[#allocation3 + $0x58] sm:$0xff] -inf
      %61 = vst [vmem:[#allocation3 + $0x60] sm:$0xff] -inf
      %62 = vst [vmem:[#allocation3 + $0x68] sm:$0xff] -inf
      %63 = vst [vmem:[#allocation3 + $0x70] sm:$0xff] -inf
      %64 = vst [vmem:[#allocation3 + $0x78] sm:$0xff] -inf
    $region21: #{tpu_custom_call.1} parent=1 // pred_fallthru
      _
    %v65 = vld [vmem:[#allocation4] sm:$0xff]
    %v66 = vld [vmem:[#allocation4 + $0x10] sm:$0xff]
    %v67 = vld [vmem:[#allocation4 + $0x20] sm:$0xff]
    %v68 = vld [vmem:[#allocation4 + $0x30] sm:$0xff]
    %v69 = vld [vmem:[#allocation4 + $0x40] sm:$0xff]
    %v70 = vld [vmem:[#allocation4 + $0x50] sm:$0xff]
    %v71 = vld [vmem:[#allocation4 + $0x60] sm:$0xff]
    %v72 = vld [vmem:[#allocation4 + $0x70] sm:$0xff]
    %v73 = vld [vmem:[#allocation4 + $0x80] sm:$0xff]
    %v74 = vld [vmem:[#allocation4 + $0x90] sm:$0xff]
    %v75 = vld [vmem:[#allocation4 + $0xa0] sm:$0xff]
    %v76 = vld [vmem:[#allocation4 + $0xb0] sm:$0xff]
    %v77 = vld [vmem:[#allocation4 + $0xc0] sm:$0xff]
    %v78 = vld [vmem:[#allocation4 + $0xd0] sm:$0xff]
    %v79 = vld [vmem:[#allocation4 + $0xe0] sm:$0xff]
    %v80 = vld [vmem:[#allocation4 + $0xf0] sm:$0xff]
    %v81 = vld [vmem:[#allocation4 + $0x8] sm:$0xff]
    %v82 = vld [vmem:[#allocation4 + $0x18] sm:$0xff]
    %v83 = vld [vmem:[#allocation4 + $0x28] sm:$0xff]
    %v84 = vld [vmem:[#allocation4 + $0x38] sm:$0xff]
    %v85 = vld [vmem:[#allocation4 + $0x48] sm:$0xff]
    %v86 = vld [vmem:[#allocation4 + $0x58] sm:$0xff]
    %v87 = vld [vmem:[#allocation4 + $0x68] sm:$0xff]
    %v88 = vld [vmem:[#allocation4 + $0x78] sm:$0xff]
    %v89 = vld [vmem:[#allocation4 + $0x88] sm:$0xff]
    %v90 = vld [vmem:[#allocation4 + $0x98] sm:$0xff]
    %v91 = vld [vmem:[#allocation4 + $0xa8] sm:$0xff]
    %v92 = vld [vmem:[#allocation4 + $0xb8] sm:$0xff]
    %v93 = vld [vmem:[#allocation4 + $0xc8] sm:$0xff]
    %v94 = vld [vmem:[#allocation4 + $0xd8] sm:$0xff]
    %v95 = vld [vmem:[#allocation4 + $0xe8] sm:$0xff]
    %v96 = vld [vmem:[#allocation4 + $0xf8] sm:$0xff]
    %v97 = vadd.f32 %v65, %v81
    %v98 = vadd.f32 %v66, %v82
    %v99 = vadd.f32 %v67, %v83
    %v100 = vadd.f32 %v68, %v84
    %v101 = vadd.f32 %v69, %v85
    %v102 = vadd.f32 %v70, %v86
    %v103 = vadd.f32 %v71, %v87
    %v104 = vadd.f32 %v72, %v88
    %v105 = vadd.f32 %v73, %v89
    %v106 = vadd.f32 %v74, %v90
    %v107 = vadd.f32 %v75, %v91
    %v108 = vadd.f32 %v76, %v92
    %v109 = vadd.f32 %v77, %v93
    %v110 = vadd.f32 %v78, %v94
    %v111 = vadd.f32 %v79, %v95
    %v112 = vadd.f32 %v80, %v96
    %v113 = vmax.f32 %v65, %v81
    %v114 = vmax.f32 %v66, %v82
    %v115 = vmax.f32 %v67, %v83
    %v116 = vmax.f32 %v68, %v84
    %v117 = vmax.f32 %v69, %v85
    %v118 = vmax.f32 %v70, %v86
    %v119 = vmax.f32 %v71, %v87
    %v120 = vmax.f32 %v72, %v88
    %v121 = vmax.f32 %v73, %v89
    %v122 = vmax.f32 %v74, %v90
    %v123 = vmax.f32 %v75, %v91
    %v124 = vmax.f32 %v76, %v92
    %v125 = vmax.f32 %v77, %v93
    %v126 = vmax.f32 %v78, %v94
    %v127 = vmax.f32 %v79, %v95
    %v128 = vmax.f32 %v80, %v96
    %v129 = vld [vmem:[#allocation2] sm:$0xff]
    %v130 = vld [vmem:[#allocation2 + $0x8] sm:$0xff]
    %v131 = vld [vmem:[#allocation2 + $0x10] sm:$0xff]
    %v132 = vld [vmem:[#allocation2 + $0x18] sm:$0xff]
    %v133 = vld [vmem:[#allocation2 + $0x20] sm:$0xff]
    %v134 = vld [vmem:[#allocation2 + $0x28] sm:$0xff]
    %v135 = vld [vmem:[#allocation2 + $0x30] sm:$0xff]
    %v136 = vld [vmem:[#allocation2 + $0x38] sm:$0xff]
    %v137 = vld [vmem:[#allocation2 + $0x40] sm:$0xff]
    %v138 = vld [vmem:[#allocation2 + $0x48] sm:$0xff]
    %v139 = vld [vmem:[#allocation2 + $0x50] sm:$0xff]
    %v140 = vld [vmem:[#allocation2 + $0x58] sm:$0xff]
    %v141 = vld [vmem:[#allocation2 + $0x60] sm:$0xff]
    %v142 = vld [vmem:[#allocation2 + $0x68] sm:$0xff]
    %v143 = vld [vmem:[#allocation2 + $0x70] sm:$0xff]
    %v144 = vld [vmem:[#allocation2 + $0x78] sm:$0xff]
    %v145 = vadd.f32 %v129, %v97
    %v146 = vadd.f32 %v130, %v98
    %v147 = vadd.f32 %v131, %v99
    %v148 = vadd.f32 %v132, %v100
    %v149 = vadd.f32 %v133, %v101
    %v150 = vadd.f32 %v134, %v102
    %v151 = vadd.f32 %v135, %v103
    %v152 = vadd.f32 %v136, %v104
    %v153 = vadd.f32 %v137, %v105
    %v154 = vadd.f32 %v138, %v106
    %v155 = vadd.f32 %v139, %v107
    %v156 = vadd.f32 %v140, %v108
    %v157 = vadd.f32 %v141, %v109
    %v158 = vadd.f32 %v142, %v110
    %v159 = vadd.f32 %v143, %v111
    %v160 = vadd.f32 %v144, %v112
    %161 = vst [vmem:[#allocation2] sm:$0xff] %v145
    %162 = vst [vmem:[#allocation2 + $0x8] sm:$0xff] %v146
    %163 = vst [vmem:[#allocation2 + $0x10] sm:$0xff] %v147
    %164 = vst [vmem:[#allocation2 + $0x18] sm:$0xff] %v148
    %165 = vst [vmem:[#allocation2 + $0x20] sm:$0xff] %v149
    %166 = vst [vmem:[#allocation2 + $0x28] sm:$0xff] %v150
    %167 = vst [vmem:[#allocation2 + $0x30] sm:$0xff] %v151
    %168 = vst [vmem:[#allocation2 + $0x38] sm:$0xff] %v152
    %169 = vst [vmem:[#allocation2 + $0x40] sm:$0xff] %v153
    %170 = vst [vmem:[#allocation2 + $0x48] sm:$0xff] %v154
    %171 = vst [vmem:[#allocation2 + $0x50] sm:$0xff] %v155
    %172 = vst [vmem:[#allocation2 + $0x58] sm:$0xff] %v156
    %173 = vst [vmem:[#allocation2 + $0x60] sm:$0xff] %v157
    %174 = vst [vmem:[#allocation2 + $0x68] sm:$0xff] %v158
    %175 = vst [vmem:[#allocation2 + $0x70] sm:$0xff] %v159
    %176 = vst [vmem:[#allocation2 + $0x78] sm:$0xff] %v160
    %v177 = vld [vmem:[#allocation3] sm:$0xff]
    %v178 = vld [vmem:[#allocation3 + $0x8] sm:$0xff]
    %v179 = vld [vmem:[#allocation3 + $0x10] sm:$0xff]
    %v180 = vld [vmem:[#allocation3 + $0x18] sm:$0xff]
    %v181 = vld [vmem:[#allocation3 + $0x20] sm:$0xff]
    %v182 = vld [vmem:[#allocation3 + $0x28] sm:$0xff]
    %v183 = vld [vmem:[#allocation3 + $0x30] sm:$0xff]
    %v184 = vld [vmem:[#allocation3 + $0x38] sm:$0xff]
    %v185 = vld [vmem:[#allocation3 + $0x40] sm:$0xff]
    %v186 = vld [vmem:[#allocation3 + $0x48] sm:$0xff]
    %v187 = vld [vmem:[#allocation3 + $0x50] sm:$0xff]
    %v188 = vld [vmem:[#allocation3 + $0x58] sm:$0xff]
    %v189 = vld [vmem:[#allocation3 + $0x60] sm:$0xff]
    %v190 = vld [vmem:[#allocation3 + $0x68] sm:$0xff]
    %v191 = vld [vmem:[#allocation3 + $0x70] sm:$0xff]
    %v192 = vld [vmem:[#allocation3 + $0x78] sm:$0xff]
    %v193 = vmax.f32 %v177, %v113
    %v194 = vmax.f32 %v178, %v114
    %v195 = vmax.f32 %v179, %v115
    %v196 = vmax.f32 %v180, %v116
    %v197 = vmax.f32 %v181, %v117
    %v198 = vmax.f32 %v182, %v118
    %v199 = vmax.f32 %v183, %v119
    %v200 = vmax.f32 %v184, %v120
    %v201 = vmax.f32 %v185, %v121
    %v202 = vmax.f32 %v186, %v122
    %v203 = vmax.f32 %v187, %v123
    %v204 = vmax.f32 %v188, %v124
    %v205 = vmax.f32 %v189, %v125
    %v206 = vmax.f32 %v190, %v126
    %v207 = vmax.f32 %v191, %v127
    %v208 = vmax.f32 %v192, %v128
    %209 = vst [vmem:[#allocation3] sm:$0xff] %v193
    %210 = vst [vmem:[#allocation3 + $0x8] sm:$0xff] %v194
    %211 = vst [vmem:[#allocation3 + $0x10] sm:$0xff] %v195
    %212 = vst [vmem:[#allocation3 + $0x18] sm:$0xff] %v196
    %213 = vst [vmem:[#allocation3 + $0x20] sm:$0xff] %v197
    %214 = vst [vmem:[#allocation3 + $0x28] sm:$0xff] %v198
    %215 = vst [vmem:[#allocation3 + $0x30] sm:$0xff] %v199
    %216 = vst [vmem:[#allocation3 + $0x38] sm:$0xff] %v200
    %217 = vst [vmem:[#allocation3 + $0x40] sm:$0xff] %v201
    %218 = vst [vmem:[#allocation3 + $0x48] sm:$0xff] %v202
    %219 = vst [vmem:[#allocation3 + $0x50] sm:$0xff] %v203
    %220 = vst [vmem:[#allocation3 + $0x58] sm:$0xff] %v204
    %221 = vst [vmem:[#allocation3 + $0x60] sm:$0xff] %v205
    %222 = vst [vmem:[#allocation3 + $0x68] sm:$0xff] %v206
    %223 = vst [vmem:[#allocation3 + $0x70] sm:$0xff] %v207
    %224 = vst [vmem:[#allocation3 + $0x78] sm:$0xff] %v208
    // Predicated region
    $region22: #{tpu_custom_call.1} parent=1 // pred_check
      %p225 = pneg %p29
    $region23: #{tpu_custom_call.1} parent=1 // pred_check_branch
      %227 = sbr.rel (%p225) target = $region25
    $region24: #{tpu_custom_call.1} parent=1 // pred_region
      %v228 = vld [vmem:[#allocation2] sm:$0xff]
      %v229 = vld [vmem:[#allocation2 + $0x8] sm:$0xff]
      %v230 = vld [vmem:[#allocation2 + $0x10] sm:$0xff]
      %v231 = vld [vmem:[#allocation2 + $0x18] sm:$0xff]
      %v232 = vld [vmem:[#allocation2 + $0x20] sm:$0xff]
      %v233 = vld [vmem:[#allocation2 + $0x28] sm:$0xff]
      %v234 = vld [vmem:[#allocation2 + $0x30] sm:$0xff]
      %v235 = vld [vmem:[#allocation2 + $0x38] sm:$0xff]
      %v236 = vld [vmem:[#allocation2 + $0x40] sm:$0xff]
      %v237 = vld [vmem:[#allocation2 + $0x48] sm:$0xff]
      %v238 = vld [vmem:[#allocation2 + $0x50] sm:$0xff]
      %v239 = vld [vmem:[#allocation2 + $0x58] sm:$0xff]
      %v240 = vld [vmem:[#allocation2 + $0x60] sm:$0xff]
      %v241 = vld [vmem:[#allocation2 + $0x68] sm:$0xff]
      %v242 = vld [vmem:[#allocation2 + $0x70] sm:$0xff]
      %v243 = vld [vmem:[#allocation2 + $0x78] sm:$0xff]
      %244 = vadd.xlane.f32.xlu0 %v228
      %v245 = vpop.xlane.xlu0 %244
      %246 = vadd.xlane.f32.xlu0 %v229
      %v247 = vpop.xlane.xlu0 %246
      %248 = vadd.xlane.f32.xlu0 %v230
      %v249 = vpop.xlane.xlu0 %248
      %250 = vadd.xlane.f32.xlu0 %v231
      %v251 = vpop.xlane.xlu0 %250
      %252 = vadd.xlane.f32.xlu0 %v232
      %v253 = vpop.xlane.xlu0 %252
      %254 = vadd.xlane.f32.xlu0 %v233
      %v255 = vpop.xlane.xlu0 %254
      %256 = vadd.xlane.f32.xlu0 %v234
      %v257 = vpop.xlane.xlu0 %256
      %258 = vadd.xlane.f32.xlu0 %v235
      %v259 = vpop.xlane.xlu0 %258
      %260 = vadd.xlane.f32.xlu0 %v236
      %v261 = vpop.xlane.xlu0 %260
      %262 = vadd.xlane.f32.xlu0 %v237
      %v263 = vpop.xlane.xlu0 %262
      %264 = vadd.xlane.f32.xlu0 %v238
      %v265 = vpop.xlane.xlu0 %264
      %266 = vadd.xlane.f32.xlu0 %v239
      %v267 = vpop.xlane.xlu0 %266
      %268 = vadd.xlane.f32.xlu0 %v240
      %v269 = vpop.xlane.xlu0 %268
      %270 = vadd.xlane.f32.xlu0 %v241
      %v271 = vpop.xlane.xlu0 %270
      %272 = vadd.xlane.f32.xlu0 %v242
      %v273 = vpop.xlane.xlu0 %272
      %274 = vadd.xlane.f32.xlu0 %v243
      %v275 = vpop.xlane.xlu0 %274
      %v276 = vmul.f32 %v245, 0.00390625
      %v277 = vmul.f32 %v247, 0.00390625
      %v278 = vmul.f32 %v249, 0.00390625
      %v279 = vmul.f32 %v251, 0.00390625
      %v280 = vmul.f32 %v253, 0.00390625
      %v281 = vmul.f32 %v255, 0.00390625
      %v282 = vmul.f32 %v257, 0.00390625
      %v283 = vmul.f32 %v259, 0.00390625
      %v284 = vmul.f32 %v261, 0.00390625
      %v285 = vmul.f32 %v263, 0.00390625
      %v286 = vmul.f32 %v265, 0.00390625
      %v287 = vmul.f32 %v267, 0.00390625
      %v288 = vmul.f32 %v269, 0.00390625
      %v289 = vmul.f32 %v271, 0.00390625
      %v290 = vmul.f32 %v273, 0.00390625
      %v291 = vmul.f32 %v275, 0.00390625
      %v292 = vld [vmem:[#allocation3] sm:$0xff]
      %v293 = vld [vmem:[#allocation3 + $0x8] sm:$0xff]
      %v294 = vld [vmem:[#allocation3 + $0x10] sm:$0xff]
      %v295 = vld [vmem:[#allocation3 + $0x18] sm:$0xff]
      %v296 = vld [vmem:[#allocation3 + $0x20] sm:$0xff]
      %v297 = vld [vmem:[#allocation3 + $0x28] sm:$0xff]
      %v298 = vld [vmem:[#allocation3 + $0x30] sm:$0xff]
      %v299 = vld [vmem:[#allocation3 + $0x38] sm:$0xff]
      %v300 = vld [vmem:[#allocation3 + $0x40] sm:$0xff]
      %v301 = vld [vmem:[#allocation3 + $0x48] sm:$0xff]
      %v302 = vld [vmem:[#allocation3 + $0x50] sm:$0xff]
      %v303 = vld [vmem:[#allocation3 + $0x58] sm:$0xff]
      %v304 = vld [vmem:[#allocation3 + $0x60] sm:$0xff]
      %v305 = vld [vmem:[#allocation3 + $0x68] sm:$0xff]
      %v306 = vld [vmem:[#allocation3 + $0x70] sm:$0xff]
      %v307 = vld [vmem:[#allocation3 + $0x78] sm:$0xff]
      %308 = vmax.xlane.f32.xlu0 %v292
      %v309 = vpop.xlane.xlu0 %308
      %310 = vmax.xlane.f32.xlu0 %v293
      %v311 = vpop.xlane.xlu0 %310
      %312 = vmax.xlane.f32.xlu0 %v294
      %v313 = vpop.xlane.xlu0 %312
      %314 = vmax.xlane.f32.xlu0 %v295
      %v315 = vpop.xlane.xlu0 %314
      %316 = vmax.xlane.f32.xlu0 %v296
      %v317 = vpop.xlane.xlu0 %316
      %318 = vmax.xlane.f32.xlu0 %v297
      %v319 = vpop.xlane.xlu0 %318
      %320 = vmax.xlane.f32.xlu0 %v298
      %v321 = vpop.xlane.xlu0 %320
      %322 = vmax.xlane.f32.xlu0 %v299
      %v323 = vpop.xlane.xlu0 %322
      %324 = vmax.xlane.f32.xlu0 %v300
      %v325 = vpop.xlane.xlu0 %324
      %326 = vmax.xlane.f32.xlu0 %v301
      %v327 = vpop.xlane.xlu0 %326
      %328 = vmax.xlane.f32.xlu0 %v302
      %v329 = vpop.xlane.xlu0 %328
      %330 = vmax.xlane.f32.xlu0 %v303
      %v331 = vpop.xlane.xlu0 %330
      %332 = vmax.xlane.f32.xlu0 %v304
      %v333 = vpop.xlane.xlu0 %332
      %334 = vmax.xlane.f32.xlu0 %v305
      %v335 = vpop.xlane.xlu0 %334
      %336 = vmax.xlane.f32.xlu0 %v306
      %v337 = vpop.xlane.xlu0 %336
      %338 = vmax.xlane.f32.xlu0 %v307
      %v339 = vpop.xlane.xlu0 %338
      %v356 = vlaneseq
      %v357 = vand.u32 %v356, 127
      %v358 = vlaneseq
      %v359 = vshrl.u32 %v358, 7
      %v360 = vsub.s32 %v357, %v359
      %v361 = vrot.slane %v276, %v360
      %v362 = vadd.s32 %v357, 4294967288
      %v363 = vlaneseq
      %v364 = vshrl.u32 %v363, 7
      %v365 = vsub.s32 %v362, %v364
      %v366 = vrot.slane %v277, %v365
      %vm367 = vcmask 130112
      %v368 = vsel %vm367, %v366, %v361
      %v369 = vadd.s32 %v357, 4294967280
      %v370 = vlaneseq
      %v371 = vshrl.u32 %v370, 7
      %v372 = vsub.s32 %v369, %v371
      %v373 = vrot.slane %v278, %v372
      %vm374 = vcmask 195712
      %v375 = vsel %vm374, %v373, %v368
      %v376 = vadd.s32 %v357, 4294967272
      %v377 = vlaneseq
      %v378 = vshrl.u32 %v377, 7
      %v379 = vsub.s32 %v376, %v378
      %v380 = vrot.slane %v279, %v379
      %vm381 = vcmask 261312
      %v382 = vsel %vm381, %v380, %v375
      %v383 = vadd.s32 %v357, 4294967264
      %v384 = vlaneseq
      %v385 = vshrl.u32 %v384, 7
      %v386 = vsub.s32 %v383, %v385
      %v387 = vrot.slane %v280, %v386
      %vm388 = vcmask 326912
      %v389 = vsel %vm388, %v387, %v382
      %v390 = vadd.s32 %v357, 4294967256
      %v391 = vlaneseq
      %v392 = vshrl.u32 %v391, 7
      %v393 = vsub.s32 %v390, %v392
      %v394 = vrot.slane %v281, %v393
      %vm395 = vcmask 392512
      %v396 = vsel %vm395, %v394, %v389
      %v397 = vadd.s32 %v357, 4294967248
      %v398 = vlaneseq
      %v399 = vshrl.u32 %v398, 7
      %v400 = vsub.s32 %v397, %v399
      %v401 = vrot.slane %v282, %v400
      %vm402 = vcmask 458112
      %v403 = vsel %vm402, %v401, %v396
      %v404 = vadd.s32 %v357, 4294967240
      %v405 = vlaneseq
      %v406 = vshrl.u32 %v405, 7
      %v407 = vsub.s32 %v404, %v406
      %v408 = vrot.slane %v283, %v407
      %vm409 = vcmask 523712
      %v410 = vsel %vm409, %v408, %v403
      %v411 = vlaneseq
      %v412 = vshrl.u32 %v411, 7
      %v413 = vsub.s32 %v357, %v412
      %v414 = vrot.slane %v284, %v413
      %v415 = vlaneseq
      %v416 = vshrl.u32 %v415, 7
      %v417 = vsub.s32 %v362, %v416
      %v418 = vrot.slane %v285, %v417
      %v419 = vsel %vm367, %v418, %v414
      %v420 = vlaneseq
      %v421 = vshrl.u32 %v420, 7
      %v422 = vsub.s32 %v369, %v421
      %v423 = vrot.slane %v286, %v422
      %v424 = vsel %vm374, %v423, %v419
      %v425 = vlaneseq
      %v426 = vshrl.u32 %v425, 7
      %v427 = vsub.s32 %v376, %v426
      %v428 = vrot.slane %v287, %v427
      %v429 = vsel %vm381, %v428, %v424
      %v430 = vlaneseq
      %v431 = vshrl.u32 %v430, 7
      %v432 = vsub.s32 %v383, %v431
      %v433 = vrot.slane %v288, %v432
      %v434 = vsel %vm388, %v433, %v429
      %v435 = vlaneseq
      %v436 = vshrl.u32 %v435, 7
      %v437 = vsub.s32 %v390, %v436
      %v438 = vrot.slane %v289, %v437
      %v439 = vsel %vm395, %v438, %v434
      %v440 = vlaneseq
      %v441 = vshrl.u32 %v440, 7
      %v442 = vsub.s32 %v397, %v441
      %v443 = vrot.slane %v290, %v442
      %v444 = vsel %vm402, %v443, %v439
      %v445 = vlaneseq
      %v446 = vshrl.u32 %v445, 7
      %v447 = vsub.s32 %v404, %v446
      %v448 = vrot.slane %v291, %v447
      %v449 = vsel %vm409, %v448, %v444
      %vm450 = vcmask 1041409
      %v451 = vsel %vm450, %v449, %v410
      %v469 = vlaneseq
      %v470 = vshrl.u32 %v469, 7
      %v471 = vsub.s32 %v357, %v470
      %v472 = vrot.slane %v309, %v471
      %v473 = vlaneseq
      %v474 = vshrl.u32 %v473, 7
      %v475 = vsub.s32 %v362, %v474
      %v476 = vrot.slane %v311, %v475
      %v477 = vsel %vm367, %v476, %v472
      %v478 = vlaneseq
      %v479 = vshrl.u32 %v478, 7
      %v480 = vsub.s32 %v369, %v479
      %v481 = vrot.slane %v313, %v480
      %v482 = vsel %vm374, %v481, %v477
      %v483 = vlaneseq
      %v484 = vshrl.u32 %v483, 7
      %v485 = vsub.s32 %v376, %v484
      %v486 = vrot.slane %v315, %v485
      %v487 = vsel %vm381, %v486, %v482
      %v488 = vlaneseq
      %v489 = vshrl.u32 %v488, 7
      %v490 = vsub.s32 %v383, %v489
      %v491 = vrot.slane %v317, %v490
      %v492 = vsel %vm388, %v491, %v487
      %v493 = vlaneseq
      %v494 = vshrl.u32 %v493, 7
      %v495 = vsub.s32 %v390, %v494
      %v496 = vrot.slane %v319, %v495
      %v497 = vsel %vm395, %v496, %v492
      %v498 = vlaneseq
      %v499 = vshrl.u32 %v498, 7
      %v500 = vsub.s32 %v397, %v499
      %v501 = vrot.slane %v321, %v500
      %v502 = vsel %vm402, %v501, %v497
      %v503 = vlaneseq
      %v504 = vshrl.u32 %v503, 7
      %v505 = vsub.s32 %v404, %v504
      %v506 = vrot.slane %v323, %v505
      %v507 = vsel %vm409, %v506, %v502
      %v508 = vlaneseq
      %v509 = vshrl.u32 %v508, 7
      %v510 = vsub.s32 %v357, %v509
      %v511 = vrot.slane %v325, %v510
      %v512 = vlaneseq
      %v513 = vshrl.u32 %v512, 7
      %v514 = vsub.s32 %v362, %v513
      %v515 = vrot.slane %v327, %v514
      %v516 = vsel %vm367, %v515, %v511
      %v517 = vlaneseq
      %v518 = vshrl.u32 %v517, 7
      %v519 = vsub.s32 %v369, %v518
      %v520 = vrot.slane %v329, %v519
      %v521 = vsel %vm374, %v520, %v516
      %v522 = vlaneseq
      %v523 = vshrl.u32 %v522, 7
      %v524 = vsub.s32 %v376, %v523
      %v525 = vrot.slane %v331, %v524
      %v526 = vsel %vm381, %v525, %v521
      %v527 = vlaneseq
      %v528 = vshrl.u32 %v527, 7
      %v529 = vsub.s32 %v383, %v528
      %v530 = vrot.slane %v333, %v529
      %v531 = vsel %vm388, %v530, %v526
      %v532 = vlaneseq
      %v533 = vshrl.u32 %v532, 7
      %v534 = vsub.s32 %v390, %v533
      %v535 = vrot.slane %v335, %v534
      %v536 = vsel %vm395, %v535, %v531
      %v537 = vlaneseq
      %v538 = vshrl.u32 %v537, 7
      %v539 = vsub.s32 %v397, %v538
      %v540 = vrot.slane %v337, %v539
      %v541 = vsel %vm402, %v540, %v536
      %v542 = vlaneseq
      %v543 = vshrl.u32 %v542, 7
      %v544 = vsub.s32 %v404, %v543
      %v545 = vrot.slane %v339, %v544
      %v546 = vsel %vm409, %v545, %v541
      %vm547 = vcmask 1043459
      %v548 = vsel %vm547, %v546, %v507
      %vm550 = vcmask 1041408
      %v551 = vsel %vm550, %v451, %v548
      %v552 = vld [vmem:[%s1] sm:$0xff]
      %v553 = vld [vmem:[%s1 + $0x8] sm:$0xff]
      %v554 = vld [vmem:[%s1 + $0x10] sm:$0xff]
      %v555 = vld [vmem:[%s1 + $0x18] sm:$0xff]
      %v556 = vld [vmem:[%s1 + $0x20] sm:$0xff]
      %v557 = vld [vmem:[%s1 + $0x28] sm:$0xff]
      %v558 = vld [vmem:[%s1 + $0x30] sm:$0xff]
      %v559 = vld [vmem:[%s1 + $0x38] sm:$0xff]
      %v560 = vld [vmem:[%s2] sm:$0xf]
      %vm561 = vcmask 523264
      %v563 = vsel %vm561, %v551, 0
      %565 = vmatprep.subr.mxu0 0.0
      %566 = vmatpush1.msra.mxu0 0.0
      %567 = vmatprep.subr.mxu0 0.0
      %568 = vmatpush1.msra.mxu0 0.0
      %569 = vmatprep.subr.mxu0 0.0
      %570 = vmatpush1.msra.mxu0 0.0
      %571 = vmatprep.subr.mxu0 0.0
      %572 = vmatpush1.msra.mxu0 0.0
      %573 = vmatprep.subr.mxu0 0.0
      %574 = vmatpush1.msra.mxu0 0.0
      %575 = vmatprep.subr.mxu0 0.0
      %576 = vmatpush1.msra.mxu0 0.0
      %577 = vmatprep.subr.mxu0 0.0
      %578 = vmatpush1.msra.mxu0 0.0
      %579 = vmatprep.subr.mxu0 0.0
      %580 = vmatpush1.msra.mxu0 0.0
      %581 = vmatprep.subr.mxu0 0.0
      %582 = vmatpush1.msra.mxu0 %v559
      %583 = vmatprep.subr.mxu0 0.0
      %584 = vmatpush1.msra.mxu0 %v558
      %585 = vmatprep.subr.mxu0 0.0
      %586 = vmatpush1.msra.mxu0 %v557
      %587 = vmatprep.subr.mxu0 0.0
      %588 = vmatpush1.msra.mxu0 %v556
      %589 = vmatprep.subr.mxu0 0.0
      %590 = vmatpush1.msra.mxu0 %v555
      %591 = vmatprep.subr.mxu0 0.0
      %592 = vmatpush1.msra.mxu0 %v554
      %593 = vmatprep.subr.mxu0 0.0
      %594 = vmatpush1.msra.mxu0 %v553
      %595 = vmatprep.subr.mxu0 0.0
      %596 = vmatpush1.msra.mxu0 %v552
      %597 = vmatprep.subr.mxu0 0.0
      %598 = vmatpush2.msra.mxu0 0.0
      %599 = vmatprep.subr.mxu0 0.0
      %600 = vmatpush2.msra.mxu0 0.0
      %601 = vmatprep.subr.mxu0 0.0
      %602 = vmatpush2.msra.mxu0 0.0
      %603 = vmatprep.subr.mxu0 0.0
      %604 = vmatpush2.msra.mxu0 0.0
      %605 = vmatprep.subr.mxu0 0.0
      %606 = vmatpush2.msra.mxu0 0.0
      %607 = vmatprep.subr.mxu0 0.0
      %608 = vmatpush2.msra.mxu0 0.0
      %609 = vmatprep.subr.mxu0 0.0
      %610 = vmatpush2.msra.mxu0 0.0
      %611 = vmatprep.subr.mxu0 0.0
      %612 = vmatpush2.msra.mxu0 0.0
      %613 = vmatprep.subr.mxu0 0.0
      %614 = vmatpush2.msra.mxu0 0.0
      %615 = vmatprep.subr.mxu0 0.0
      %616 = vmatpush2.msra.mxu0 0.0
      %617 = vmatprep.subr.mxu0 0.0
      %618 = vmatpush2.msra.mxu0 0.0
      %619 = vmatprep.subr.mxu0 0.0
      %620 = vmatpush2.msra.mxu0 0.0
      %621 = vmatprep.subr.mxu0 0.0
      %622 = vmatpush2.msra.mxu0 0.0
      %623 = vmatprep.subr.mxu0 0.0
      %624 = vmatpush2.msra.mxu0 0.0
      %625 = vmatprep.subr.mxu0 0.0
      %626 = vmatpush2.msra.mxu0 0.0
      %627 = vmatprep.subr.mxu0 0.0
      %628 = vmatpush2.msra.mxu0 0.0
      %629 = vmatprep.mubr.f32.mxu0 0.0
      %630 = vmatmul.mubr.f32.gmra.mxu0 %v563
      %v631 = vpop.f32.mrf.mxu0
      %v632 = vadd.f32 0.0, %v631
      %v633 = vpop.f32.mrf.mxu0
      %634 = vdwg.mxu0
      %v635 = vmax.f32 %v632, 0.0
      %vm636 = vcmask 31744
      %v638 = vsel %vm636, %v635, 0
      %vm640 = vcmask 1043456
      %v642 = vsel %vm640, %v560, 0
      %644 = vmatprep.subr.mxu0 0.0
      %645 = vmatpush1.msra.mxu0 0.0
      %646 = vmatprep.subr.mxu0 0.0
      %647 = vmatpush1.msra.mxu0 0.0
      %648 = vmatprep.subr.mxu0 0.0
      %649 = vmatpush1.msra.mxu0 0.0
      %650 = vmatprep.subr.mxu0 0.0
      %651 = vmatpush1.msra.mxu0 0.0
      %652 = vmatprep.subr.mxu0 0.0
      %653 = vmatpush1.msra.mxu0 0.0
      %654 = vmatprep.subr.mxu0 0.0
      %655 = vmatpush1.msra.mxu0 0.0
      %656 = vmatprep.subr.mxu0 0.0
      %657 = vmatpush1.msra.mxu0 0.0
      %658 = vmatprep.subr.mxu0 0.0
      %659 = vmatpush1.msra.mxu0 0.0
      %660 = vmatprep.subr.mxu0 0.0
      %661 = vmatpush1.msra.mxu0 0.0
      %662 = vmatprep.subr.mxu0 0.0
      %663 = vmatpush1.msra.mxu0 0.0
      %664 = vmatprep.subr.mxu0 0.0
      %665 = vmatpush1.msra.mxu0 0.0
      %666 = vmatprep.subr.mxu0 0.0
      %667 = vmatpush1.msra.mxu0 0.0
      %668 = vmatprep.subr.mxu0 0.0
      %669 = vmatpush1.msra.mxu0 0.0
      %670 = vmatprep.subr.mxu0 0.0
      %671 = vmatpush1.msra.mxu0 0.0
      %672 = vmatprep.subr.mxu0 0.0
      %673 = vmatpush1.msra.mxu0 0.0
      %674 = vmatprep.subr.mxu0 0.0
      %675 = vmatpush1.msra.mxu0 %v642
      %676 = vmatprep.subr.mxu0 0.0
      %677 = vmatpush2.msra.mxu0 0.0
      %678 = vmatprep.subr.mxu0 0.0
      %679 = vmatpush2.msra.mxu0 0.0
      %680 = vmatprep.subr.mxu0 0.0
      %681 = vmatpush2.msra.mxu0 0.0
      %682 = vmatprep.subr.mxu0 0.0
      %683 = vmatpush2.msra.mxu0 0.0
      %684 = vmatprep.subr.mxu0 0.0
      %685 = vmatpush2.msra.mxu0 0.0
      %686 = vmatprep.subr.mxu0 0.0
      %687 = vmatpush2.msra.mxu0 0.0
      %688 = vmatprep.subr.mxu0 0.0
      %689 = vmatpush2.msra.mxu0 0.0
      %690 = vmatprep.subr.mxu0 0.0
      %691 = vmatpush2.msra.mxu0 0.0
      %692 = vmatprep.subr.mxu0 0.0
      %693 = vmatpush2.msra.mxu0 0.0
      %694 = vmatprep.subr.mxu0 0.0
      %695 = vmatpush2.msra.mxu0 0.0
      %696 = vmatprep.subr.mxu0 0.0
      %697 = vmatpush2.msra.mxu0 0.0
      %698 = vmatprep.subr.mxu0 0.0
      %699 = vmatpush2.msra.mxu0 0.0
      %700 = vmatprep.subr.mxu0 0.0
      %701 = vmatpush2.msra.mxu0 0.0
      %702 = vmatprep.subr.mxu0 0.0
      %703 = vmatpush2.msra.mxu0 0.0
      %704 = vmatprep.subr.mxu0 0.0
      %705 = vmatpush2.msra.mxu0 0.0
      %706 = vmatprep.subr.mxu0 0.0
      %707 = vmatpush2.msra.mxu0 0.0
      %708 = vmatprep.mubr.f32.mxu0 0.0
      %709 = vmatmul.mubr.f32.gmra.mxu0 %v638
      %v710 = vpop.f32.mrf.mxu0
      %v711 = vadd.f32 0.0, %v710
      %v712 = vpop.f32.mrf.mxu0
      %713 = vdwg.mxu0
      %v715 = vrot.slane %v711, 2
      %v717 = vadd.f32 %v711, %v715
      %v718 = vsub.f32 0.0, %v717
      %v719 = vmul.f32 %v718, 1.442695
      %v720 = vpow.pop %v719
      %v721 = vadd.f32 %v720, 1.0
      %v722 = vrcp.pop %v721
      %vm723 = vcmask 517120
      %724 = vst.msk [vmem:[#allocation7] sm:$0x3] %vm723, %v722
    $region25: #{tpu_custom_call.1} parent=1 // pred_fallthru
      _
    // Predicated region
    $region26: #{tpu_custom_call.1} parent=1 // pred_check
      _
    $region27: #{tpu_custom_call.1} parent=1 // pred_check_branch
      %726 = sbr.rel (0) target = $region29
    $region28: #{tpu_custom_call.1} parent=1 // pred_region
      %s728 = ssub.s32 32, 32
      %729 = vsyncadd [#allocation6], %s728
      %s731 = sshll.u32 [#allocation7], 4
      %s732 = int_to_ptr.vmem [resolvable:$true] %s731
      %734 = dma.vmem_to_hbm [thread:$0]  %s732, 32, %s3, [#allocation6]
    $region29: #{tpu_custom_call.1} parent=1 // pred_fallthru
      _
    // Predicated region
    $region30: #{tpu_custom_call.1} parent=1 // pred_check
      _
    $region31: #{tpu_custom_call.1} parent=1 // pred_check_branch
      %736 = sbr.rel (0) target = $region33
    $region32: #{tpu_custom_call.1} parent=1 // pred_region
      %737 = dma.done [#allocation6], 32
    $region33: #{tpu_custom_call.1} parent=1 // pred_fallthru
      _
    %738 = vsyncpa [#allocation5], 1
    %739 = vsyncpa [#allocation6], 1

</llo_original>
